<compile_context>
chip_gen: v7x
topology: tpu7x:2x2x1
jax: 0.10.0
libtpu: 0.0.40
codegen_flags: <defaults>
</compile_context>

<pallas_src>
import functools

import jax
import jax.numpy as jnp
from jax import lax
from jax.experimental import pallas as pl
from jax.experimental.pallas import tpu as pltpu


def _round_up(x, m):
    return ((x + m - 1) // m) * m


def _vmem_budget_bytes():
    """Scoped-VMEM budget: ~3/4 of physical (v7x: 48 MiB, v5e/v6e: 96 MiB)."""
    try:
        cap = int(pltpu.get_tpu_info().vmem_capacity_bytes)
    except Exception:
        cap = 64 * 1024 * 1024  # v7x-safe assumption
    return min((cap * 3) // 4, 96 * 1024 * 1024)


def _choose_batch_tile(B, F, H, vmem_budget, param_bytes):
    """Largest batch tile keeping double-buffered x, f32 activations and the
    lane-dense output inside the VMEM budget."""
    per_row = 4 * (2 * F + 4 * H + 2)      # x (dbuf) + activations + out (dbuf)
    avail = max(vmem_budget - 2 * param_bytes - (4 << 20), 128 * per_row)
    tb_budget = min(avail // per_row, 64 * 1024)
    b8 = _round_up(B, 8)
    if b8 <= min(tb_budget, 1024):
        return b8                          # small problem: one tile covers it
    # Lane-aligned tiles; aim for >= 2 tiles so pass 2 can megacore-shard on
    # v7x and DMA pipelines behind compute.
    tb = min(tb_budget, _round_up(-(-B // 2), 128))
    return max(128, (tb // 128) * 128)


# --------------------------------------------------------------------------
# Pass 1: shifted per-feature sum / sum-of-squares over batch tiles.
#   grid = (n_cores, tiles_per_core); leading axis "parallel" (per-core partial
#   sums), trailing axis "arbitrary" (resident accumulator, init via pl.when).
# --------------------------------------------------------------------------
def _bn_stats_kernel(n_rows, tb, tiles_per_core, need_mask,
                     shift_ref, x_ref, sum_ref, sumsq_ref):
    @pl.when(pl.program_id(1) == 0)
    def _():
        sum_ref[...] = jnp.zeros_like(sum_ref)
        sumsq_ref[...] = jnp.zeros_like(sumsq_ref)

    d = x_ref[...].astype(jnp.float32) - shift_ref[...]
    if need_mask:  # ragged last tile: zero out-of-range rows (no jnp.pad copy)
        start = (pl.program_id(0) * tiles_per_core + pl.program_id(1)) * tb
        row_id = lax.broadcasted_iota(jnp.int32, d.shape, 0) + start
        d = jnp.where(row_id < n_rows, d, 0.0)
    sum_ref[...] += jnp.sum(d, axis=0, keepdims=True).reshape(sum_ref.shape)
    sumsq_ref[...] += jnp.sum(d * d, axis=0, keepdims=True).reshape(sumsq_ref.shape)


# --------------------------------------------------------------------------
# Pass 2: pure MLP over batch tiles (BN already folded into layer 0 weights).
#   Final Linear (H -> 1) as VPU multiply + lane reduce; output lane-major.
# --------------------------------------------------------------------------
def _mlp_kernel(n_linear, *refs):
    # refs = (x, w0, b0, [w_i, b_i] * (n_linear - 2), w_last_row, b_last, o)
    x_ref = refs[0]
    o_ref = refs[-1]
    layer_refs = refs[1:-1]

    h = x_ref[...].astype(jnp.float32)                       # (tb, F)
    for i in range(n_linear - 1):
        w = layer_refs[2 * i][...]                           # (in_i, out_i)
        b = layer_refs[2 * i + 1][...]                       # (1, out_i)
        h = jnp.dot(h, w, preferred_element_type=jnp.float32) + b
        h = jnp.maximum(h, 0.0)

    w_last = layer_refs[-2][...]                             # (1, H)
    b_last = layer_refs[-1][...]                             # (1, 1)
    out_row = jnp.sum(h * w_last, axis=-1).reshape(1, -1) + b_last
    o_ref[...] = out_row.astype(o_ref.dtype)                 # (1, tb) dense store


# --------------------------------------------------------------------------
# Wrapper
# --------------------------------------------------------------------------
def nn_norm_forward(x, gamma, beta, weights, biases, *, eps=1e-5, block_b=None):
    """x: (B, n_in); weights[i]: (in_i, out_i) (pre-transposed); biases[i]: (out_i,)."""
    B, F = x.shape
    n_linear = len(weights)
    assert n_linear >= 2, "expects at least one hidden layer + output layer"
    assert weights[-1].shape[1] == 1, "final layer must map to a single output"
    H_max = max(int(w.shape[1]) for w in weights[:-1])

    vmem_limit = _vmem_budget_bytes()
    param_bytes = 4 * sum(int(w.size) + int(b.size) for w, b in zip(weights, biases))

    if block_b is None:
        tb = _choose_batch_tile(B, F, H_max, vmem_limit, param_bytes)
    else:
        tb = _round_up(min(int(block_b), _round_up(B, 8)), 8)
    n_tiles = pl.cdiv(B, tb)
    if n_tiles > 1:
        tb = _round_up(tb, 128)            # lane-dense (1, tb) output blocks
        n_tiles = pl.cdiv(B, tb)
    b_pad = n_tiles * tb
    need_mask = b_pad != B

    x = x.astype(jnp.float32)
    gamma = gamma.astype(jnp.float32)
    beta = beta.astype(jnp.float32)

    # ---------------- Pass 1: shifted BN statistics ----------------
    shift_row = x[:1, :]                                     # (1, F) shift point
    n_cores = 2 if (n_tiles >= 2 and n_tiles % 2 == 0) else 1
    tiles_per_core = n_tiles // n_cores

    stats_cost = pl.CostEstimate(
        flops=4 * b_pad * F, transcendentals=0,
        bytes_accessed=4 * B * F + 8 * n_cores * F + 4 * F)

    x_idx = lambda c, j: (c * tiles_per_core + j, 0)
    part_sum, part_sumsq = pl.pallas_call(
        functools.partial(_bn_stats_kernel, B, tb, tiles_per_core, need_mask),
        out_shape=(jax.ShapeDtypeStruct((n_cores, 1, F), jnp.float32),
                   jax.ShapeDtypeStruct((n_cores, 1, F), jnp.float32)),
        grid=(n_cores, tiles_per_core),
        in_specs=[pl.BlockSpec((1, F), lambda c, j: (0, 0)),
                  pl.BlockSpec((tb, F), x_idx)],
        out_specs=(pl.BlockSpec((1, 1, F), lambda c, j: (c, 0, 0)),
                   pl.BlockSpec((1, 1, F), lambda c, j: (c, 0, 0))),
        compiler_params=pltpu.CompilerParams(
            dimension_semantics=("parallel", "arbitrary"),
            vmem_limit_bytes=vmem_limit),
        cost_estimate=stats_cost,
    )(shift_row, x)

    # ---------------- Tiny XLA glue: fold BN into the first Linear ----------
    sum_d = jnp.sum(part_sum.reshape(n_cores, F), axis=0)
    sumsq_d = jnp.sum(part_sumsq.reshape(n_cores, F), axis=0)
    mean = shift_row[0] + sum_d / B
    var = jnp.maximum(sumsq_d / B - (sum_d / B) ** 2, 0.0)   # biased, train-mode
    a = gamma * lax.rsqrt(var + eps)                         # (F,)
    s = beta - mean * a                                      # (F,)
    w0_f32 = weights[0].astype(jnp.float32)
    w0 = w0_f32 * a[:, None]                                 # (F, H) folded
    b0 = biases[0].astype(jnp.float32) + jnp.dot(
        s, w0_f32, precision=lax.Precision.HIGHEST)          # (H,) folded

    # ---------------- Pass 2: batch-tiled MLP, lane-dense output ------------
    operands = [x, w0, b0.reshape(1, -1)]
    in_specs = [pl.BlockSpec((tb, F), lambda i: (i, 0)),
                pl.BlockSpec(w0.shape, lambda i: (0, 0)),
                pl.BlockSpec((1, w0.shape[1]), lambda i: (0, 0))]
    for li in range(1, n_linear - 1):
        w = weights[li].astype(jnp.float32)
        b = biases[li].astype(jnp.float32).reshape(1, -1)
        operands += [w, b]
        in_specs += [pl.BlockSpec(w.shape, lambda i: (0, 0)),
                     pl.BlockSpec(b.shape, lambda i: (0, 0))]
    w_last = weights[-1].astype(jnp.float32).reshape(1, -1)  # (1, H)
    b_last = biases[-1].astype(jnp.float32).reshape(1, 1)    # (1, 1)
    operands += [w_last, b_last]
    in_specs += [pl.BlockSpec(w_last.shape, lambda i: (0, 0)),
                 pl.BlockSpec(b_last.shape, lambda i: (0, 0))]

    dims = [F] + [int(w.shape[1]) for w in weights]
    flops = sum(2 * b_pad * dims[k] * dims[k + 1] for k in range(n_linear))
    apply_cost = pl.CostEstimate(
        flops=int(flops), transcendentals=0,
        bytes_accessed=int(4 * B * F + 4 * b_pad + param_bytes))

    out_row = pl.pallas_call(
        functools.partial(_mlp_kernel, n_linear),
        out_shape=jax.ShapeDtypeStruct((1, b_pad), x.dtype),
        grid=(n_tiles,),
        in_specs=in_specs,
        out_specs=pl.BlockSpec((1, tb), lambda i: (0, i)),
        compiler_params=pltpu.CompilerParams(
            dimension_semantics=("parallel",),
            vmem_limit_bytes=vmem_limit),
        cost_estimate=apply_cost,
    )(*operands)

    return out_row[0, :B].reshape(B, 1)


# --------------------------------------------------------------------------
# Pure-JAX reference (training-mode BatchNorm1d + MLP).
# --------------------------------------------------------------------------
def _reference(x, gamma, beta, weights, biases, eps=1e-5):
    x = x.astype(jnp.float32)
    mean = jnp.mean(x, axis=0, keepdims=True)
    var = jnp.mean((x - mean) ** 2, axis=0, keepdims=True)
    x = (x - mean) / jnp.sqrt(var + eps)
    x = x * gamma[None, :] + beta[None, :]
    n_linear = len(weights)
    for i, (w, b) in enumerate(zip(weights, biases)):
        x = jnp.dot(x, w, precision=lax.Precision.HIGHEST) + b[None, :]
        if i < n_linear - 1:
            x = jnp.maximum(x, 0.0)
    return x


if __name__ == "__main__":
    n_in, n_hidden, hidden_layers = 32, 32, 2

    def make_params(key):
        keys = jax.random.split(key, 2 * (hidden_layers + 1) + 2)
        gamma = 1.0 + 0.1 * jax.random.normal(keys[0], (n_in,), jnp.float32)
        beta = 0.1 * jax.random.normal(keys[1], (n_in,), jnp.float32)
        weights, biases = [], []
        fan_in = n_in
        kidx = 2
        for _ in range(hidden_layers):
            scale = 1.0 / jnp.sqrt(jnp.float32(fan_in))
            weights.append(jax.random.uniform(
                keys[kidx], (fan_in, n_hidden), jnp.float32, -scale, scale))
            biases.append(jax.random.uniform(
                keys[kidx + 1], (n_hidden,), jnp.float32, -scale, scale))
            kidx += 2
            fan_in = n_hidden
        scale = 1.0 / jnp.sqrt(jnp.float32(fan_in))
        weights.append(jax.random.uniform(
            keys[kidx], (fan_in, 1), jnp.float32, -scale, scale))
        biases.append(jax.random.uniform(
            keys[kidx + 1], (1,), jnp.float32, -scale, scale))
        return gamma, beta, weights, biases

    key = jax.random.PRNGKey(0)
    kp, kx1, kx2 = jax.random.split(key, 3)
    gamma, beta, weights, biases = make_params(kp)

    def check(x, **kw):
        ref = _reference(x, gamma, beta, weights, biases)
        out = nn_norm_forward(x, gamma, beta, weights, biases, **kw)
        jax.block_until_ready(out)
        assert out.shape == ref.shape, (out.shape, ref.shape)
        err = float(jnp.max(jnp.abs(out - ref)))
        assert jnp.allclose(out, ref, atol=2e-4, rtol=2e-4), err

    # 1) Small batch: single (8-aligned) tile, masked tail rows in pass 1.
    check(jax.random.normal(kx1, (20, n_in), jnp.float32))

    # 2) Larger batch, forced multi-tile: 4 lane-aligned tiles of 256 rows,
    #    ragged last tile masked, pass-1 reduction split 2-way across the
    #    leading "parallel" axis, lane-dense (1, tb) output blocks in pass 2.
    check(jax.random.normal(kx2, (1000, n_in), jnp.float32), block_b=256)

    # 3) Same batch through the auto (VMEM-budget-derived) tiling path.
    check(jax.random.normal(kx2, (1000, n_in), jnp.float32))

    print("KERNEL_OK")
</pallas_src>

<mosaic_0001>
module attributes {stable_mosaic.version = 11 : i64} {
  func.func @_bn_stats_kernel(%arg0: i32, %arg1: i32, %arg2: memref<1x32xf32, #tpu.memory_space<vmem>>, %arg3: memref<24x32xf32, #tpu.memory_space<vmem>>, %arg4: memref<1x1x32xf32, #tpu.memory_space<vmem>>, %arg5: memref<1x1x32xf32, #tpu.memory_space<vmem>>) attributes {dimension_semantics = [#tpu.dimension_semantics<parallel>, #tpu.dimension_semantics<arbitrary>], iteration_bounds = array<i64: 1, 1>, scalar_prefetch = 0 : i64, scratch_operands = 0 : i64, tpu.core_type = #tpu.core_type<tc>, window_params = [{pipeline_mode = #tpu.pipeline_mode<synchronous>, transform_indices = @transform_0, window_bounds = array<i64: 1, 32>}, {transform_indices = @transform_1, window_bounds = array<i64: 24, 32>}, {transform_indices = @transform_2, window_bounds = array<i64: 1, 1, 32>}, {transform_indices = @transform_3, window_bounds = array<i64: 1, 1, 32>}]} {
    %c0_i32 = arith.constant 0 : i32
    %0 = arith.cmpi eq, %arg1, %c0_i32 : i32
    %1 = arith.extui %0 : i1 to i32
    %c0_i32_0 = arith.constant 0 : i32
    %2 = arith.cmpi ne, %1, %c0_i32_0 : i32
    scf.if %2 {
      %cst_18 = arith.constant 0.000000e+00 : f32
      %30 = vector.broadcast %cst_18 : f32 to vector<1x1x32xf32>
      %c0_19 = arith.constant 0 : index
      %c0_20 = arith.constant 0 : index
      %c0_21 = arith.constant 0 : index
      %31 = vector.load %arg4[%c0_19, %c0_20, %c0_21] : memref<1x1x32xf32, #tpu.memory_space<vmem>>, vector<1x1x32xf32>
      tpu.vector_store %arg4[%c0_19, %c0_20, %c0_21], %30 {strides = array<i32>} : memref<1x1x32xf32, #tpu.memory_space<vmem>>, vector<1x1x32xf32>,
      %cst_22 = arith.constant 0.000000e+00 : f32
      %32 = vector.broadcast %cst_22 : f32 to vector<1x1x32xf32>
      %c0_23 = arith.constant 0 : index
      %c0_24 = arith.constant 0 : index
      %c0_25 = arith.constant 0 : index
      %33 = vector.load %arg5[%c0_23, %c0_24, %c0_25] : memref<1x1x32xf32, #tpu.memory_space<vmem>>, vector<1x1x32xf32>
      tpu.vector_store %arg5[%c0_23, %c0_24, %c0_25], %32 {strides = array<i32>} : memref<1x1x32xf32, #tpu.memory_space<vmem>>, vector<1x1x32xf32>,
    } else {
    }
    %c0 = arith.constant 0 : index
    %c0_1 = arith.constant 0 : index
    %3 = vector.load %arg3[%c0, %c0_1] : memref<24x32xf32, #tpu.memory_space<vmem>>, vector<24x32xf32>
    %c0_2 = arith.constant 0 : index
    %c0_3 = arith.constant 0 : index
    %4 = vector.load %arg2[%c0_2, %c0_3] : memref<1x32xf32, #tpu.memory_space<vmem>>, vector<1x32xf32>
    %5 = vector.broadcast %4 : vector<1x32xf32> to vector<24x32xf32>
    %6 = arith.subf %3, %5 : vector<24x32xf32>
    %c1_i32 = arith.constant 1 : i32
    %7 = arith.muli %arg0, %c1_i32 : i32
    %8 = arith.addi %7, %arg1 : i32
    %c24_i32 = arith.constant 24 : i32
    %9 = arith.muli %8, %c24_i32 : i32
    %10 = tpu.iota {dimensions = array<i32: 0>} : vector<24x32xi32>
    %11 = vector.broadcast %9 : i32 to vector<24x32xi32>
    %12 = arith.addi %10, %11 : vector<24x32xi32>
    %c20_i32 = arith.constant 20 : i32
    %13 = vector.broadcast %c20_i32 : i32 to vector<24x32xi32>
    %14 = arith.cmpi slt, %12, %13 : vector<24x32xi32>
    %cst = arith.constant 0.000000e+00 : f32
    %15 = vector.broadcast %cst : f32 to vector<24x32xf32>
    %16 = arith.select %14, %6, %15 : vector<24x32xi1>, vector<24x32xf32>
    %c0_4 = arith.constant 0 : index
    %c0_5 = arith.constant 0 : index
    %c0_6 = arith.constant 0 : index
    %17 = vector.load %arg4[%c0_4, %c0_5, %c0_6] : memref<1x1x32xf32, #tpu.memory_space<vmem>>, vector<1x1x32xf32>
    %cst_7 = arith.constant dense<0.000000e+00> : vector<32xf32>
    %18 = vector.multi_reduction <add>, %16, %cst_7 [0] : vector<24x32xf32> to vector<32xf32>
    %19 = vector.shape_cast %18 : vector<32xf32> to vector<1x32xf32>
    %20 = vector.shape_cast %19 : vector<1x32xf32> to vector<1x1x32xf32>
    %21 = arith.addf %17, %20 : vector<1x1x32xf32>
    %c0_8 = arith.constant 0 : index
    %c0_9 = arith.constant 0 : index
    %c0_10 = arith.constant 0 : index
    %22 = vector.load %arg4[%c0_8, %c0_9, %c0_10] : memref<1x1x32xf32, #tpu.memory_space<vmem>>, vector<1x1x32xf32>
    tpu.vector_store %arg4[%c0_8, %c0_9, %c0_10], %21 {strides = array<i32>} : memref<1x1x32xf32, #tpu.memory_space<vmem>>, vector<1x1x32xf32>,
    %c0_11 = arith.constant 0 : index
    %c0_12 = arith.constant 0 : index
    %c0_13 = arith.constant 0 : index
    %23 = vector.load %arg5[%c0_11, %c0_12, %c0_13] : memref<1x1x32xf32, #tpu.memory_space<vmem>>, vector<1x1x32xf32>
    %24 = arith.mulf %16, %16 : vector<24x32xf32>
    %cst_14 = arith.constant dense<0.000000e+00> : vector<32xf32>
    %25 = vector.multi_reduction <add>, %24, %cst_14 [0] : vector<24x32xf32> to vector<32xf32>
    %26 = vector.shape_cast %25 : vector<32xf32> to vector<1x32xf32>
    %27 = vector.shape_cast %26 : vector<1x32xf32> to vector<1x1x32xf32>
    %28 = arith.addf %23, %27 : vector<1x1x32xf32>
    %c0_15 = arith.constant 0 : index
    %c0_16 = arith.constant 0 : index
    %c0_17 = arith.constant 0 : index
    %29 = vector.load %arg5[%c0_15, %c0_16, %c0_17] : memref<1x1x32xf32, #tpu.memory_space<vmem>>, vector<1x1x32xf32>
    tpu.vector_store %arg5[%c0_15, %c0_16, %c0_17], %28 {strides = array<i32>} : memref<1x1x32xf32, #tpu.memory_space<vmem>>, vector<1x1x32xf32>,
    return
  }
  func.func @transform_0(%arg0: i32, %arg1: i32) -> (i32, i32) {
    %c0_i32 = arith.constant 0 : i32
    %c0_i32_0 = arith.constant 0 : i32
    %c0_i32_1 = arith.constant 0 : i32
    return %c0_i32, %c0_i32_0 : i32, i32
  }
  func.func @transform_1(%arg0: i32, %arg1: i32) -> (i32, i32) {
    %c1_i32 = arith.constant 1 : i32
    %0 = arith.muli %arg0, %c1_i32 : i32
    %1 = arith.addi %0, %arg1 : i32
    %c0_i32 = arith.constant 0 : i32
    %c0_i32_0 = arith.constant 0 : i32
    return %1, %c0_i32 : i32, i32
  }
  func.func @transform_2(%arg0: i32, %arg1: i32) -> (i32, i32, i32) {
    %c0_i32 = arith.constant 0 : i32
    %c0_i32_0 = arith.constant 0 : i32
    %c0_i32_1 = arith.constant 0 : i32
    return %arg0, %c0_i32, %c0_i32_0 : i32, i32, i32
  }
  func.func @transform_3(%arg0: i32, %arg1: i32) -> (i32, i32, i32) {
    %c0_i32 = arith.constant 0 : i32
    %c0_i32_0 = arith.constant 0 : i32
    %c0_i32_1 = arith.constant 0 : i32
    return %arg0, %c0_i32, %c0_i32_0 : i32, i32, i32
  }
}

</mosaic_0001>

<llo_original>
// kernel: tpu_custom_call.1
$region0: #{tpu_custom_call.1}
  #allocation0 [shape = 'u32[]', space=smem, size = 0x4, offset = 0x4, fixed_abs, tag = 'smem constant byte address 0x4 - core index']
  #allocation1 [shape = 'u32[144,128]{1,0:T(1,128)}', space=vmem, size = 0x12000, scoped, tag = 'internal scratch']
  %s0 = inlined_call_operand.hbm [shape: f32[1,32], index: 0, kind: input, shape index: {}]
  %s1 = inlined_call_operand.hbm [shape: f32[20,32], index: 1, kind: input, shape index: {}]
  %s2 = inlined_call_operand.hbm [shape: f32[1,1,32], index: 2, kind: output, shape index: {0}]
  %s3 = inlined_call_operand.hbm [shape: f32[1,1,32], index: 3, kind: output, shape index: {1}]
  %4 = xla_tuple %s2, %s3
  %s5 = sld [smem:[#allocation0]]
  $region38: #{tpu_custom_call.1} parent=0
    _
  %s7 = ssub.s32 1, %s5
  %s8 = scalar_select 0, %s7, %s5
  $region1: #{tpu_custom_call.1} parent=0
    #allocation2 [shape = 'u8[512]{0}', space=vmem, size = 0x400, scoped, tag = 'input window, operand 0, single buffered']
    #allocation3 [shape = 's32[1]{0}', space=sflag, size = 0x4, scoped, tag = 'scoped memory for tpu_custom_call.1']
    #allocation4 [shape = 's32[1]{0}', space=sflag, size = 0x4, scoped, tag = 'scoped memory for tpu_custom_call.1']
    #allocation5 [shape = 'u8[12288]{0}', space=vmem, size = 0x3000, scoped, tag = 'input window, operand 1, single buffered']
    #allocation6 [shape = 's32[1]{0}', space=sflag, size = 0x4, scoped, tag = 'scoped memory for tpu_custom_call.1']
    #allocation7 [shape = 'u8[512]{0}', space=vmem, size = 0x400, scoped, tag = 'output window, operand 0, single buffered']
    #allocation8 [shape = 'u8[512]{0}', space=vmem, size = 0x400, scoped, tag = 'output window, operand 1, single buffered']
    #allocation9 [shape = 's32[1]{0}', space=sflag, size = 0x4, scoped, tag = 'scoped memory for tpu_custom_call.1']
    %9 = vsyncpa [#allocation3], 0
    %10 = vsyncpa [#allocation6], 0
    %11 = vsyncpa [#allocation4], 0
    %12 = vsyncpa [#allocation9], 0
    // Predicated region
    $region2: #{tpu_custom_call.1} parent=1 // pred_check
      _
    $region3: #{tpu_custom_call.1} parent=1 // pred_check_branch
      %14 = sbr.rel (0) target = $region5
    $region4: #{tpu_custom_call.1} parent=1 // pred_region
      %s16 = ssub.s32 16, 16
      %17 = vsyncadd [#allocation3], %s16
      %s19 = sshll.u32 [#allocation2], 4
      %s20 = int_to_ptr.vmem [resolvable:$true] %s19
      %22 = dma.hbm_to_vmem [thread:$0]  %s0, 16, %s20, [#allocation3]
    $region5: #{tpu_custom_call.1} parent=1 // pred_fallthru
      _
    // Predicated region
    $region6: #{tpu_custom_call.1} parent=1 // pred_check
      _
    $region7: #{tpu_custom_call.1} parent=1 // pred_check_branch
      %24 = sbr.rel (0) target = $region9
    $region8: #{tpu_custom_call.1} parent=1 // pred_region
      %s25 = sadd.s32 0, 0
      %s26 = smul.u32 3, %s25
      %s28 = ssub.s32 384, 384
      %29 = vsyncadd [#allocation6], %s28
      %s30 = smul.addr %s26, 128
      %s31 = scalar_lea.hbm %s1, %s30
      %s32 = sshll.u32 [#allocation5], 4
      %s33 = int_to_ptr.vmem [resolvable:$true] %s32
      %38 = dma.hbm_to_vmem [thread:$0]  %s31, 384, %s33, [#allocation6], 128, 128, 8
    $region9: #{tpu_custom_call.1} parent=1 // pred_fallthru
      _
    // Predicated region
    $region10: #{tpu_custom_call.1} parent=1 // pred_check
      _
    $region11: #{tpu_custom_call.1} parent=1 // pred_check_branch
      %40 = sbr.rel (0) target = $region13
    $region12: #{tpu_custom_call.1} parent=1 // pred_region
      %41 = dma.done [#allocation3], 16
    $region13: #{tpu_custom_call.1} parent=1 // pred_fallthru
      _
    // Predicated region
    $region14: #{tpu_custom_call.1} parent=1 // pred_check
      _
    $region15: #{tpu_custom_call.1} parent=1 // pred_check_branch
      %43 = sbr.rel (0) target = $region17
    $region16: #{tpu_custom_call.1} parent=1 // pred_region
      %44 = dma.done [#allocation6], 384
    $region17: #{tpu_custom_call.1} parent=1 // pred_fallthru
      _
    %s45 = sadd.s32 0, 0
    %s46 = smul.u32 3, %s45
    %p47 = scmp.eq.s32.totalorder 0, 0
    // Predicated region
    $region18: #{tpu_custom_call.1} parent=1 // pred_check
      %p48 = pneg %p47
    $region19: #{tpu_custom_call.1} parent=1 // pred_check_branch
      %50 = sbr.rel (%p48) target = $region21
    $region20: #{tpu_custom_call.1} parent=1 // pred_region
      %vm51 = vcmask 253952
      %52 = vst.msk [vmem:[#allocation7] sm:$0x1] %vm51, 0.0
      %53 = vst.msk [vmem:[#allocation8] sm:$0x1] %vm51, 0.0
    $region21: #{tpu_custom_call.1} parent=1 // pred_fallthru
      _
    %v54 = vld [vmem:[#allocation5] sm:$0xff]
    %v55 = vld [vmem:[#allocation5 + $0x8] sm:$0xff]
    %v56 = vld [vmem:[#allocation5 + $0x10] sm:$0xff]
    %v57 = vld [vmem:[#allocation2] sm:$0x1]
    %v59 = vlaneseq
    %v60 = vshrl.u32 %v59, 7
    %v61 = vsub.s32 0, %v60
    %v62 = vrot.slane %v57, %v61
    %v64 = vsub.f32 %v54, %v62
    %v65 = vsub.f32 %v55, %v62
    %v66 = vsub.f32 %v56, %v62
    %s67 = sadd.s32 0, 0
    %s68 = smul.u32 %s67, 24
    %v69 = vlaneseq
    %v70 = vshrl.u32 %v69, 7
    %v71 = vadd.s32 %v70, 8
    %v72 = vadd.s32 %v70, 16
    %v73 = vstv %s68
    %v74 = vadd.s32 %v70, %v73
    %v75 = vadd.s32 %v71, %v73
    %v76 = vadd.s32 %v72, %v73
    %vm77 = vcmp.lt.s32.totalorder %v74, 20
    %vm78 = vcmp.lt.s32.totalorder %v75, 20
    %vm79 = vcmp.lt.s32.totalorder %v76, 20
    %v80 = vsel %vm77, %v64, 0.0
    %v81 = vsel %vm78, %v65, 0.0
    %v82 = vsel %vm79, %v66, 0.0
    %v83 = vld [vmem:[#allocation7] sm:$0x1]
    %vm84 = vcmask 261120
    %v85 = vsel %vm84, %v80, 0.0
    %v86 = vsel %vm84, %v81, 0.0
    %v87 = vadd.f32 %v85, %v86
    %v88 = vsel %vm84, %v82, 0.0
    %v89 = vadd.f32 %v87, %v88
    %v90 = vrot.slane %v89, 4
    %v91 = vadd.f32 %v89, %v90
    %v92 = vrot.slane %v91, 2
    %v93 = vadd.f32 %v91, %v92
    %v94 = vrot.slane %v93, 1
    %v95 = vadd.f32 %v93, %v94
    %v96 = vadd.f32 %v83, %v95
    %vm97 = vcmask 253952
    %98 = vst.msk [vmem:[#allocation7] sm:$0x1] %vm97, %v96
    %v99 = vld [vmem:[#allocation8] sm:$0x1]
    %v100 = vmul.f32 %v80, %v80
    %v101 = vmul.f32 %v81, %v81
    %v102 = vmul.f32 %v82, %v82
    %v103 = vsel %vm84, %v100, 0.0
    %v104 = vsel %vm84, %v101, 0.0
    %v105 = vadd.f32 %v103, %v104
    %v106 = vsel %vm84, %v102, 0.0
    %v107 = vadd.f32 %v105, %v106
    %v108 = vrot.slane %v107, 4
    %v109 = vadd.f32 %v107, %v108
    %v110 = vrot.slane %v109, 2
    %v111 = vadd.f32 %v109, %v110
    %v112 = vrot.slane %v111, 1
    %v113 = vadd.f32 %v111, %v112
    %v114 = vadd.f32 %v99, %v113
    %115 = vst.msk [vmem:[#allocation8] sm:$0x1] %vm97, %v114
    // Predicated region
    $region22: #{tpu_custom_call.1} parent=1 // pred_check
      _
    $region23: #{tpu_custom_call.1} parent=1 // pred_check_branch
      %117 = sbr.rel (0) target = $region25
    $region24: #{tpu_custom_call.1} parent=1 // pred_region
      %s119 = ssub.s32 16, 16
      %120 = vsyncadd [#allocation4], %s119
      %s122 = sshll.u32 [#allocation7], 4
      %s123 = int_to_ptr.vmem [resolvable:$true] %s122
      %125 = dma.vmem_to_hbm [thread:$0]  %s123, 16, %s2, [#allocation4]
    $region25: #{tpu_custom_call.1} parent=1 // pred_fallthru
      _
    // Predicated region
    $region26: #{tpu_custom_call.1} parent=1 // pred_check
      _
    $region27: #{tpu_custom_call.1} parent=1 // pred_check_branch
      %127 = sbr.rel (0) target = $region29
    $region28: #{tpu_custom_call.1} parent=1 // pred_region
      %s129 = ssub.s32 16, 16
      %130 = vsyncadd [#allocation9], %s129
      %s132 = sshll.u32 [#allocation8], 4
      %s133 = int_to_ptr.vmem [resolvable:$true] %s132
      %135 = dma.vmem_to_hbm [thread:$0]  %s133, 16, %s3, [#allocation9]
    $region29: #{tpu_custom_call.1} parent=1 // pred_fallthru
      _
    // Predicated region
    $region30: #{tpu_custom_call.1} parent=1 // pred_check
      _
    $region31: #{tpu_custom_call.1} parent=1 // pred_check_branch
      %137 = sbr.rel (0) target = $region33
    $region32: #{tpu_custom_call.1} parent=1 // pred_region
      %138 = dma.done [#allocation4], 16
    $region33: #{tpu_custom_call.1} parent=1 // pred_fallthru
      _
    // Predicated region
    $region34: #{tpu_custom_call.1} parent=1 // pred_check
      _
    $region35: #{tpu_custom_call.1} parent=1 // pred_check_branch
      %140 = sbr.rel (0) target = $region37
    $region36: #{tpu_custom_call.1} parent=1 // pred_region
      %141 = dma.done [#allocation9], 16
    $region37: #{tpu_custom_call.1} parent=1 // pred_fallthru
      _
    %142 = vsyncpa [#allocation3], 1
    %143 = vsyncpa [#allocation6], 1
    %144 = vsyncpa [#allocation4], 1
    %145 = vsyncpa [#allocation9], 1

</llo_original>
